<compile_context>
chip_gen: v7x
topology: tpu7x:2x2x1
jax: 0.10.0
libtpu: 0.0.40
codegen_flags: <defaults>
</compile_context>

<pallas_src>
import functools

import jax
import jax.numpy as jnp
from jax import lax
from jax.experimental import pallas as pl
from jax.experimental.pallas import tpu as pltpu

_VMEM_LIMIT = 48 * 1024 * 1024  # explicit scoped-VMEM; fits v5e/v6e/v7x


def _pick_tile(dim, candidates=(512, 256, 128)):
    """Largest MXU-friendly tile that divides `dim`; fall back to full dim."""
    for t in candidates:
        if dim % t == 0:
            return t
    return dim  # small / odd dims: single full-extent block


# ----------------------------------------------------------------------------
# Tiled matmul + bias (+ optional fused ReLU)
# ----------------------------------------------------------------------------
def _matmul_bias_kernel(x_ref, w_ref, b_ref, o_ref, acc_ref, *, activation):
    @pl.when(pl.program_id(2) == 0)
    def _():
        acc_ref[...] = jnp.zeros_like(acc_ref)

    acc_ref[...] += jnp.dot(x_ref[...], w_ref[...],
                            preferred_element_type=jnp.float32)

    @pl.when(pl.program_id(2) == pl.num_programs(2) - 1)
    def _():
        y = acc_ref[...] + b_ref[...]
        if activation == "relu":
            y = jnp.maximum(y, 0.0)
        o_ref[...] = y.astype(o_ref.dtype)


def linear(x, w, b, activation=None):
    """x: (M, K) @ w: (K, N) + b, tiled over (M, N, K)."""
    M, K = x.shape
    N = w.shape[1]
    tm, tn, tk = _pick_tile(M), _pick_tile(N), _pick_tile(K)
    return pl.pallas_call(
        functools.partial(_matmul_bias_kernel, activation=activation),
        out_shape=jax.ShapeDtypeStruct((M, N), x.dtype),
        grid=(M // tm, N // tn, K // tk),
        in_specs=[
            pl.BlockSpec((tm, tk), lambda i, j, k: (i, k)),
            pl.BlockSpec((tk, tn), lambda i, j, k: (k, j)),
            pl.BlockSpec((1, tn), lambda i, j, k: (0, j)),
        ],
        out_specs=pl.BlockSpec((tm, tn), lambda i, j, k: (i, j)),
        scratch_shapes=[pltpu.VMEM((tm, tn), jnp.float32)],
        compiler_params=pltpu.CompilerParams(
            dimension_semantics=("parallel", "parallel", "arbitrary"),
            vmem_limit_bytes=_VMEM_LIMIT),
        cost_estimate=pl.CostEstimate(
            flops=2 * M * N * K, transcendentals=0,
            bytes_accessed=4 * (M * K + K * N + M * N + N)),
    )(x, w, b.reshape(1, N))


# ----------------------------------------------------------------------------
# Tiled matmul + bias + residual add + LayerNorm (fused epilogue).
# N is kept as a single block so each row's LN reduction is complete in-tile.
# ----------------------------------------------------------------------------
def _matmul_add_ln_kernel(x_ref, w_ref, b_ref, res_ref, g_ref, bt_ref,
                          o_ref, acc_ref, *, eps):
    @pl.when(pl.program_id(1) == 0)
    def _():
        acc_ref[...] = jnp.zeros_like(acc_ref)

    acc_ref[...] += jnp.dot(x_ref[...], w_ref[...],
                            preferred_element_type=jnp.float32)

    @pl.when(pl.program_id(1) == pl.num_programs(1) - 1)
    def _():
        h = acc_ref[...] + b_ref[...] + res_ref[...].astype(jnp.float32)
        mean = jnp.mean(h, axis=-1, keepdims=True)
        var = jnp.mean(jnp.square(h - mean), axis=-1, keepdims=True)
        normed = (h - mean) * lax.rsqrt(var + eps)
        o_ref[...] = (normed * g_ref[...] + bt_ref[...]).astype(o_ref.dtype)


def linear_add_layernorm(x, w, b, res, gamma, beta, eps=1e-5):
    """LayerNorm(res + (x @ w + b)) with PyTorch semantics (eps=1e-5)."""
    M, K = x.shape
    N = w.shape[1]
    tm, tk = _pick_tile(M), _pick_tile(K)
    return pl.pallas_call(
        functools.partial(_matmul_add_ln_kernel, eps=eps),
        out_shape=jax.ShapeDtypeStruct((M, N), x.dtype),
        grid=(M // tm, K // tk),
        in_specs=[
            pl.BlockSpec((tm, tk), lambda i, k: (i, k)),
            pl.BlockSpec((tk, N), lambda i, k: (k, 0)),
            pl.BlockSpec((1, N), lambda i, k: (0, 0)),
            pl.BlockSpec((tm, N), lambda i, k: (i, 0)),
            pl.BlockSpec((1, N), lambda i, k: (0, 0)),
            pl.BlockSpec((1, N), lambda i, k: (0, 0)),
        ],
        out_specs=pl.BlockSpec((tm, N), lambda i, k: (i, 0)),
        scratch_shapes=[pltpu.VMEM((tm, N), jnp.float32)],
        compiler_params=pltpu.CompilerParams(
            dimension_semantics=("parallel", "arbitrary"),
            vmem_limit_bytes=_VMEM_LIMIT),
        cost_estimate=pl.CostEstimate(
            flops=2 * M * N * K, transcendentals=0,
            bytes_accessed=4 * (M * K + K * N + 2 * M * N + 3 * N)),
    )(x, w, b.reshape(1, N), res, gamma.reshape(1, N), beta.reshape(1, N))


# ----------------------------------------------------------------------------
# Multi-head attention core: one batch per grid step, all heads in-kernel.
#   q: (B, T, D)  k/v: (B, S, D)  bias: (B, T, S) additive (pad/causal, -1e9)
# outputs: attn out (B, T, D) lane-dense, head-averaged weights (B, T, S).
# ----------------------------------------------------------------------------
def _mha_kernel(q_ref, k_ref, v_ref, bias_ref, o_ref, w_ref, *,
                num_heads, scale):
    D = q_ref.shape[2]
    hd = D // num_heads

    q = q_ref[0].astype(jnp.float32) * scale   # fold scale into q (T x hd, not T x S)
    k = k_ref[0]
    v = v_ref[0]
    bias = bias_ref[0]                          # (T, S)

    w_acc = jnp.zeros(bias.shape, jnp.float32)
    outs = []
    for h in range(num_heads):                  # static unroll over heads
        sl = slice(h * hd, (h + 1) * hd)
        # QK^T without materializing k.T (contract last dims directly).
        s = lax.dot_general(q[:, sl], k[:, sl],
                            (((1,), (1,)), ((), ())),
                            preferred_element_type=jnp.float32)
        s = s + bias
        m = jnp.max(s, axis=-1, keepdims=True)
        p = jnp.exp(s - m)
        inv = pl.reciprocal(jnp.sum(p, axis=-1, keepdims=True), approx=True)
        p = p * inv
        w_acc = w_acc + p
        outs.append(jnp.dot(p.astype(v.dtype), v[:, sl],
                            preferred_element_type=jnp.float32))

    o_ref[0] = jnp.concatenate(outs, axis=-1).astype(o_ref.dtype)
    w_ref[0] = (w_acc * (1.0 / num_heads)).astype(w_ref.dtype)


def attention(q, k, v, bias, num_heads, scale):
    B, T, D = q.shape
    S = k.shape[1]
    # TODO(synk): for very long S the (T, S) scores + weights output dominate
    # VMEM/HBM; a flash-style S-tiling is only possible if the full attention
    # weights output is dropped (the module's API requires returning it).
    return pl.pallas_call(
        functools.partial(_mha_kernel, num_heads=num_heads, scale=scale),
        out_shape=(jax.ShapeDtypeStruct((B, T, D), q.dtype),
                   jax.ShapeDtypeStruct((B, T, S), jnp.float32)),
        grid=(B,),
        in_specs=[
            pl.BlockSpec((1, T, D), lambda b: (b, 0, 0)),
            pl.BlockSpec((1, S, D), lambda b: (b, 0, 0)),
            pl.BlockSpec((1, S, D), lambda b: (b, 0, 0)),
            pl.BlockSpec((1, T, S), lambda b: (b, 0, 0)),
        ],
        out_specs=(pl.BlockSpec((1, T, D), lambda b: (b, 0, 0)),
                   pl.BlockSpec((1, T, S), lambda b: (b, 0, 0))),
        compiler_params=pltpu.CompilerParams(
            dimension_semantics=("parallel",),
            vmem_limit_bytes=_VMEM_LIMIT),
    )(q, k, v, bias)


# ----------------------------------------------------------------------------
# Module glue
# ----------------------------------------------------------------------------
def _build_attn_bias(key_padding_mask, attn_mask, B, T, S):
    bias = jnp.zeros((B, T, S), jnp.float32)
    if key_padding_mask is not None:
        bias = bias + jnp.where(key_padding_mask[:, None, :], -1e9, 0.0)
    if attn_mask is not None:
        bias = bias + attn_mask.astype(jnp.float32)[None, :, :]
    return bias


def transformer_decoder_layer(x, mask, params, num_heads,
                              encoder_out=None, encoder_mask=None,
                              self_attn_mask=None):
    B, T, D = x.shape
    hd = D // num_heads
    scale = float(hd) ** -0.5

    # ---------------- self attention (fused QKV projection) ----------------
    res = x
    p = params["self_attn"]
    qkv = linear(x.reshape(B * T, D), p["w_qkv"], p["b_qkv"])       # (B*T, 3D)
    q = qkv[:, :D].reshape(B, T, D)
    k = qkv[:, D:2 * D].reshape(B, T, D)
    v = qkv[:, 2 * D:].reshape(B, T, D)
    bias = _build_attn_bias(mask, self_attn_mask, B, T, T)
    attn_out, weight = attention(q, k, v, bias, num_heads, scale)
    # output projection fused with residual add + LayerNorm
    x = linear_add_layernorm(attn_out.reshape(B * T, D), p["wo"], p["bo"],
                             res.reshape(B * T, D),
                             params["self_ln_g"], params["self_ln_b"]
                             ).reshape(B, T, D)

    # ---------------- cross attention (fused KV projection) ----------------
    if encoder_out is not None:
        S = encoder_out.shape[1]
        res = x
        p = params["enc_attn"]
        q = linear(x.reshape(B * T, D), p["wq"], p["bq"]).reshape(B, T, D)
        kv = linear(encoder_out.reshape(B * S, D), p["w_kv"], p["b_kv"])
        k = kv[:, :D].reshape(B, S, D)
        v = kv[:, D:].reshape(B, S, D)
        bias = _build_attn_bias(encoder_mask, None, B, T, S)
        attn_out, weight = attention(q, k, v, bias, num_heads, scale)
        x = linear_add_layernorm(attn_out.reshape(B * T, D), p["wo"], p["bo"],
                                 res.reshape(B * T, D),
                                 params["enc_ln_g"], params["enc_ln_b"]
                                 ).reshape(B, T, D)

    # ---------------- feed forward (fc1+ReLU, fc2 fused with add+LN) -------
    res = x
    h = linear(x.reshape(B * T, D), params["fc1_w"], params["fc1_b"],
               activation="relu")
    x = linear_add_layernorm(h, params["fc2_w"], params["fc2_b"],
                             res.reshape(B * T, D),
                             params["final_ln_g"], params["final_ln_b"]
                             ).reshape(B, T, D)
    return x, weight


# ----------------------------------------------------------------------------
# Deterministic parameter construction (fused QKV / KV layouts)
# ----------------------------------------------------------------------------
def make_params(key, d_model):
    d_ff = d_model << 1
    keys = jax.random.split(key, 16)
    ki = iter(keys)

    def w(shape):
        return jax.random.normal(next(ki), shape, jnp.float32) * 0.02

    self_attn = dict(
        w_qkv=w((d_model, 3 * d_model)), b_qkv=jnp.zeros((3 * d_model,), jnp.float32),
        wo=w((d_model, d_model)), bo=jnp.zeros((d_model,), jnp.float32),
    )
    enc_attn = dict(
        wq=w((d_model, d_model)), bq=jnp.zeros((d_model,), jnp.float32),
        w_kv=w((d_model, 2 * d_model)), b_kv=jnp.zeros((2 * d_model,), jnp.float32),
        wo=w((d_model, d_model)), bo=jnp.zeros((d_model,), jnp.float32),
    )
    return dict(
        self_attn=self_attn,
        self_ln_g=jnp.ones((d_model,), jnp.float32),
        self_ln_b=jnp.zeros((d_model,), jnp.float32),
        enc_attn=enc_attn,
        enc_ln_g=jnp.ones((d_model,), jnp.float32),
        enc_ln_b=jnp.zeros((d_model,), jnp.float32),
        fc1_w=w((d_model, d_ff)), fc1_b=jnp.zeros((d_ff,), jnp.float32),
        fc2_w=w((d_ff, d_model)), fc2_b=jnp.zeros((d_model,), jnp.float32),
        final_ln_g=jnp.ones((d_model,), jnp.float32),
        final_ln_b=jnp.zeros((d_model,), jnp.float32),
    )


# ----------------------------------------------------------------------------
if __name__ == "__main__":
    B, T, S, D, H = 2, 8, 8, 32, 4

    key = jax.random.PRNGKey(0)
    k_x, k_enc, k_p = jax.random.split(key, 3)

    x = jax.random.normal(k_x, (B, T, D), jnp.float32)
    encoder_out = jax.random.normal(k_enc, (B, S, D), jnp.float32)

    # key-padding masks: True = padded position
    mask = jnp.zeros((B, T), jnp.bool_).at[1, T - 2:].set(True)
    encoder_mask = jnp.zeros((B, S), jnp.bool_).at[1, S - 1:].set(True)

    # causal additive self-attention mask
    causal = jnp.where(jnp.tril(jnp.ones((T, T), jnp.bool_)), 0.0, -1e9)

    params = make_params(k_p, D)

    out, weight = transformer_decoder_layer(
        x, mask, params, H,
        encoder_out=encoder_out, encoder_mask=encoder_mask,
        self_attn_mask=causal)

    jax.block_until_ready((out, weight))
    assert out.shape == (B, T, D)
    assert weight.shape == (B, T, S)
    assert bool(jnp.all(jnp.isfinite(out)))
    assert bool(jnp.all(jnp.isfinite(weight)))
    print("KERNEL_OK")
</pallas_src>

<mosaic_0001>
module attributes {stable_mosaic.version = 11 : i64} {
  func.func @_matmul_bias_kernel(%arg0: i32, %arg1: i32, %arg2: i32, %arg3: memref<16x32xf32, #tpu.memory_space<vmem>>, %arg4: memref<32x96xf32, #tpu.memory_space<vmem>>, %arg5: memref<1x96xf32, #tpu.memory_space<vmem>>, %arg6: memref<16x96xf32, #tpu.memory_space<vmem>>, %arg7: memref<16x96xf32, #tpu.memory_space<vmem>>) attributes {dimension_semantics = [#tpu.dimension_semantics<parallel>, #tpu.dimension_semantics<parallel>, #tpu.dimension_semantics<arbitrary>], iteration_bounds = array<i64: 1, 1, 1>, scalar_prefetch = 0 : i64, scratch_operands = 1 : i64, tpu.core_type = #tpu.core_type<tc>, window_params = [{transform_indices = @transform_0, window_bounds = array<i64: 16, 32>}, {transform_indices = @transform_1, window_bounds = array<i64: 32, 96>}, {transform_indices = @transform_2, window_bounds = array<i64: 1, 96>}, {transform_indices = @transform_3, window_bounds = array<i64: 16, 96>}]} {
    %c0_i32 = arith.constant 0 : i32
    %0 = arith.cmpi eq, %arg2, %c0_i32 : i32
    %1 = arith.extui %0 : i1 to i32
    %c0_i32_0 = arith.constant 0 : i32
    %2 = arith.cmpi ne, %1, %c0_i32_0 : i32
    scf.if %2 {
      %cst_10 = arith.constant 0.000000e+00 : f32
      %12 = vector.broadcast %cst_10 : f32 to vector<16x96xf32>
      %c0_11 = arith.constant 0 : index
      %c0_12 = arith.constant 0 : index
      %13 = vector.load %arg7[%c0_11, %c0_12] : memref<16x96xf32, #tpu.memory_space<vmem>>, vector<16x96xf32>
      tpu.vector_store %arg7[%c0_11, %c0_12], %12 {strides = array<i32>} : memref<16x96xf32, #tpu.memory_space<vmem>>, vector<16x96xf32>,
    } else {
    }
    %c0 = arith.constant 0 : index
    %c0_1 = arith.constant 0 : index
    %3 = vector.load %arg7[%c0, %c0_1] : memref<16x96xf32, #tpu.memory_space<vmem>>, vector<16x96xf32>
    %c0_2 = arith.constant 0 : index
    %c0_3 = arith.constant 0 : index
    %4 = vector.load %arg3[%c0_2, %c0_3] : memref<16x32xf32, #tpu.memory_space<vmem>>, vector<16x32xf32>
    %c0_4 = arith.constant 0 : index
    %c0_5 = arith.constant 0 : index
    %5 = vector.load %arg4[%c0_4, %c0_5] : memref<32x96xf32, #tpu.memory_space<vmem>>, vector<32x96xf32>
    %cst = arith.constant dense<0.000000e+00> : vector<16x96xf32>
    %6 = tpu.matmul %4, %5, %cst {dimension_numbers = #tpu.dot_dimension_numbers<[1], [0], [0], [1], [0, 0, 1, 1], [], []>} : vector<16x32xf32>, vector<32x96xf32>, vector<16x96xf32> -> vector<16x96xf32>
    %7 = arith.addf %3, %6 : vector<16x96xf32>
    %c0_6 = arith.constant 0 : index
    %c0_7 = arith.constant 0 : index
    %8 = vector.load %arg7[%c0_6, %c0_7] : memref<16x96xf32, #tpu.memory_space<vmem>>, vector<16x96xf32>
    tpu.vector_store %arg7[%c0_6, %c0_7], %7 {strides = array<i32>} : memref<16x96xf32, #tpu.memory_space<vmem>>, vector<16x96xf32>,
    %c0_i32_8 = arith.constant 0 : i32
    %9 = arith.cmpi eq, %arg2, %c0_i32_8 : i32
    %10 = arith.extui %9 : i1 to i32
    %c0_i32_9 = arith.constant 0 : i32
    %11 = arith.cmpi ne, %10, %c0_i32_9 : i32
    scf.if %11 {
      %c0_10 = arith.constant 0 : index
      %c0_11 = arith.constant 0 : index
      %12 = vector.load %arg7[%c0_10, %c0_11] : memref<16x96xf32, #tpu.memory_space<vmem>>, vector<16x96xf32>
      %c0_12 = arith.constant 0 : index
      %c0_13 = arith.constant 0 : index
      %13 = vector.load %arg5[%c0_12, %c0_13] : memref<1x96xf32, #tpu.memory_space<vmem>>, vector<1x96xf32>
      %14 = vector.broadcast %13 : vector<1x96xf32> to vector<16x96xf32>
      %15 = arith.addf %12, %14 : vector<16x96xf32>
      %c0_14 = arith.constant 0 : index
      %c0_15 = arith.constant 0 : index
      %16 = vector.load %arg6[%c0_14, %c0_15] : memref<16x96xf32, #tpu.memory_space<vmem>>, vector<16x96xf32>
      tpu.vector_store %arg6[%c0_14, %c0_15], %15 {strides = array<i32>} : memref<16x96xf32, #tpu.memory_space<vmem>>, vector<16x96xf32>,
    } else {
    }
    return
  }
  func.func @transform_0(%arg0: i32, %arg1: i32, %arg2: i32) -> (i32, i32) {
    %c0_i32 = arith.constant 0 : i32
    return %arg0, %arg2 : i32, i32
  }
  func.func @transform_1(%arg0: i32, %arg1: i32, %arg2: i32) -> (i32, i32) {
    %c0_i32 = arith.constant 0 : i32
    return %arg2, %arg1 : i32, i32
  }
  func.func @transform_2(%arg0: i32, %arg1: i32, %arg2: i32) -> (i32, i32) {
    %c0_i32 = arith.constant 0 : i32
    %c0_i32_0 = arith.constant 0 : i32
    return %c0_i32, %arg1 : i32, i32
  }
  func.func @transform_3(%arg0: i32, %arg1: i32, %arg2: i32) -> (i32, i32) {
    %c0_i32 = arith.constant 0 : i32
    return %arg0, %arg1 : i32, i32
  }
}

</mosaic_0001>

<llo_original>
// kernel: tpu_custom_call.1
$region0: #{tpu_custom_call.1}
  #allocation0 [shape = 'u32[]', space=smem, size = 0x4, offset = 0x4, fixed_abs, tag = 'smem constant byte address 0x4 - core index']
  #allocation1 [shape = 'u32[144,128]{1,0:T(1,128)}', space=vmem, size = 0x12000, scoped, tag = 'internal scratch']
  #allocation2 [shape = 'f32[16,96]{1,0:T(8,128)}', space=vmem, size = 0x2000, scoped, tag = 'scratch operand']
  %s0 = inlined_call_operand.hbm [shape: f32[16,32], index: 0, kind: input, shape index: {}]
  %s1 = inlined_call_operand.hbm [shape: f32[32,96], index: 1, kind: input, shape index: {}]
  %s2 = inlined_call_operand.vmem [shape: f32[1,96], index: 2, kind: input, shape index: {}]
  %s3 = inlined_call_operand.hbm [shape: f32[16,96], index: 3, kind: output, shape index: {}]
  %s4 = sld [smem:[#allocation0]]
  $region38: #{tpu_custom_call.1} parent=0
    _
  %s6 = ssub.s32 1, %s4
  %s7 = scalar_select 0, %s6, %s4
  $region1: #{tpu_custom_call.1} parent=0
    #allocation3 [shape = 'u8[8192]{0}', space=vmem, size = 0x2000, scoped, tag = 'input window, operand 0, single buffered']
    #allocation4 [shape = 's32[1]{0}', space=sflag, size = 0x4, scoped, tag = 'scoped memory for tpu_custom_call.1']
    #allocation5 [shape = 's32[1]{0}', space=sflag, size = 0x4, scoped, tag = 'scoped memory for tpu_custom_call.1']
    #allocation6 [shape = 'u8[16384]{0}', space=vmem, size = 0x4000, scoped, tag = 'input window, operand 1, single buffered']
    #allocation7 [shape = 's32[1]{0}', space=sflag, size = 0x4, scoped, tag = 'scoped memory for tpu_custom_call.1']
    #allocation8 [shape = 'u8[8192]{0}', space=vmem, size = 0x2000, scoped, tag = 'output window, operand 0, single buffered']
    %8 = vsyncpa [#allocation4], 0
    %9 = vsyncpa [#allocation7], 0
    %10 = vsyncpa [#allocation5], 0
    // Predicated region
    $region2: #{tpu_custom_call.1} parent=1 // pred_check
      _
    $region3: #{tpu_custom_call.1} parent=1 // pred_check_branch
      %12 = sbr.rel (0) target = $region5
    $region4: #{tpu_custom_call.1} parent=1 // pred_region
      %s14 = ssub.s32 256, 256
      %15 = vsyncadd [#allocation4], %s14
      %s16 = sshll.u32 [#allocation3], 4
      %s17 = int_to_ptr.vmem [resolvable:$true] %s16
      %22 = dma.hbm_to_vmem [thread:$0]  %s0, 256, %s17, [#allocation4], 128, 128, 8
    $region5: #{tpu_custom_call.1} parent=1 // pred_fallthru
      _
    // Predicated region
    $region6: #{tpu_custom_call.1} parent=1 // pred_check
      _
    $region7: #{tpu_custom_call.1} parent=1 // pred_check_branch
      %24 = sbr.rel (0) target = $region9
    $region8: #{tpu_custom_call.1} parent=1 // pred_region
      %s26 = ssub.s32 512, 512
      %27 = vsyncadd [#allocation7], %s26
      %s28 = sshll.u32 [#allocation6], 4
      %s29 = int_to_ptr.vmem [resolvable:$true] %s28
      %34 = dma.hbm_to_vmem [thread:$0]  %s1, 512, %s29, [#allocation7], 128, 128, 8
    $region9: #{tpu_custom_call.1} parent=1 // pred_fallthru
      _
    // Predicated region
    $region10: #{tpu_custom_call.1} parent=1 // pred_check
      _
    $region11: #{tpu_custom_call.1} parent=1 // pred_check_branch
      %36 = sbr.rel (0) target = $region13
    $region12: #{tpu_custom_call.1} parent=1 // pred_region
      _
    $region13: #{tpu_custom_call.1} parent=1 // pred_fallthru
      _
    // Predicated region
    $region14: #{tpu_custom_call.1} parent=1 // pred_check
      _
    $region15: #{tpu_custom_call.1} parent=1 // pred_check_branch
      %38 = sbr.rel (0) target = $region17
    $region16: #{tpu_custom_call.1} parent=1 // pred_region
      %39 = dma.done [#allocation4], 256
    $region17: #{tpu_custom_call.1} parent=1 // pred_fallthru
      _
    // Predicated region
    $region18: #{tpu_custom_call.1} parent=1 // pred_check
      _
    $region19: #{tpu_custom_call.1} parent=1 // pred_check_branch
      %41 = sbr.rel (0) target = $region21
    $region20: #{tpu_custom_call.1} parent=1 // pred_region
      %42 = dma.done [#allocation7], 512
    $region21: #{tpu_custom_call.1} parent=1 // pred_fallthru
      _
    %p43 = scmp.eq.s32.totalorder 0, 0
    // Predicated region
    $region22: #{tpu_custom_call.1} parent=1 // pred_check
      %p44 = pneg %p43
    $region23: #{tpu_custom_call.1} parent=1 // pred_check_branch
      %46 = sbr.rel (%p44) target = $region25
    $region24: #{tpu_custom_call.1} parent=1 // pred_region
      %vm47 = vcmask 785408
      %48 = vst.msk [vmem:[#allocation2] sm:$0xff] %vm47, 0.0
      %49 = vst.msk [vmem:[#allocation2 + $0x8] sm:$0xff] %vm47, 0.0
    $region25: #{tpu_custom_call.1} parent=1 // pred_fallthru
      _
    %v50 = vld [vmem:[#allocation2] sm:$0xff]
    %v51 = vld [vmem:[#allocation2 + $0x8] sm:$0xff]
    %v52 = vld [vmem:[#allocation3] sm:$0xff]
    %v53 = vld [vmem:[#allocation3 + $0x8] sm:$0xff]
    %v54 = vld [vmem:[#allocation6] sm:$0xff]
    %v55 = vld [vmem:[#allocation6 + $0x8] sm:$0xff]
    %v56 = vld [vmem:[#allocation6 + $0x10] sm:$0xff]
    %v57 = vld [vmem:[#allocation6 + $0x18] sm:$0xff]
    %vm58 = vcmask 261120
    %v60 = vsel %vm58, %v52, 0
    %v63 = vsel %vm58, %v53, 0
    %65 = vmatprep.subr.mxu0 0.0
    %66 = vmatpush1.msra.mxu0 %v54
    %67 = vmatprep.subr.mxu0 0.0
    %68 = vmatpush1.msra.mxu0 %v55
    %69 = vmatprep.subr.mxu0 0.0
    %70 = vmatpush1.msra.mxu0 %v56
    %71 = vmatprep.subr.mxu0 0.0
    %72 = vmatpush1.msra.mxu0 %v57
    %73 = vmatprep.subr.mxu0 0.0
    %74 = vmatpush1.msra.mxu0 0.0
    %75 = vmatprep.subr.mxu0 0.0
    %76 = vmatpush1.msra.mxu0 0.0
    %77 = vmatprep.subr.mxu0 0.0
    %78 = vmatpush1.msra.mxu0 0.0
    %79 = vmatprep.subr.mxu0 0.0
    %80 = vmatpush1.msra.mxu0 0.0
    %81 = vmatprep.subr.mxu0 0.0
    %82 = vmatpush1.msra.mxu0 0.0
    %83 = vmatprep.subr.mxu0 0.0
    %84 = vmatpush1.msra.mxu0 0.0
    %85 = vmatprep.subr.mxu0 0.0
    %86 = vmatpush1.msra.mxu0 0.0
    %87 = vmatprep.subr.mxu0 0.0
    %88 = vmatpush1.msra.mxu0 0.0
    %89 = vmatprep.subr.mxu0 0.0
    %90 = vmatpush1.msra.mxu0 0.0
    %91 = vmatprep.subr.mxu0 0.0
    %92 = vmatpush1.msra.mxu0 0.0
    %93 = vmatprep.subr.mxu0 0.0
    %94 = vmatpush1.msra.mxu0 0.0
    %95 = vmatprep.subr.mxu0 0.0
    %96 = vmatpush1.msra.mxu0 0.0
    %97 = vmatprep.subr.mxu0 0.0
    %98 = vmatpush1.msra.mxu0 0.0
    %99 = vmatprep.subr.mxu0 0.0
    %100 = vmatpush1.msra.mxu0 0.0
    %101 = vmatprep.subr.mxu0 0.0
    %102 = vmatpush1.msra.mxu0 0.0
    %103 = vmatprep.subr.mxu0 0.0
    %104 = vmatpush1.msra.mxu0 0.0
    %105 = vmatprep.subr.mxu0 0.0
    %106 = vmatpush1.msra.mxu0 0.0
    %107 = vmatprep.subr.mxu0 0.0
    %108 = vmatpush1.msra.mxu0 0.0
    %109 = vmatprep.subr.mxu0 0.0
    %110 = vmatpush1.msra.mxu0 0.0
    %111 = vmatprep.subr.mxu0 0.0
    %112 = vmatpush1.msra.mxu0 0.0
    %113 = vmatprep.subr.mxu0 0.0
    %114 = vmatpush1.msra.mxu0 0.0
    %115 = vmatprep.subr.mxu0 0.0
    %116 = vmatpush1.msra.mxu0 0.0
    %117 = vmatprep.subr.mxu0 0.0
    %118 = vmatpush1.msra.mxu0 0.0
    %119 = vmatprep.subr.mxu0 0.0
    %120 = vmatpush1.msra.mxu0 0.0
    %121 = vmatprep.subr.mxu0 0.0
    %122 = vmatpush1.msra.mxu0 0.0
    %123 = vmatprep.subr.mxu0 0.0
    %124 = vmatpush1.msra.mxu0 0.0
    %125 = vmatprep.subr.mxu0 0.0
    %126 = vmatpush1.msra.mxu0 0.0
    %127 = vmatprep.subr.mxu0 0.0
    %128 = vmatpush1.msra.mxu0 0.0
    %129 = vmatprep.mubr.f32.mxu0 0.0
    %130 = vmatmul.mubr.f32.gmra.mrb[0].mxu0 %v60
    %v131 = vpop.f32.mrb[0].mxu0
    %v132 = vadd.f32 0.0, %v131
    %v133 = vpop.f32.mrb[0].mxu0
    %134 = vmatprep.mubr.f32.mxu0 0.0
    %135 = vmatmul.mubr.f32.gmra.mrb[0].mxu0 %v63
    %v136 = vpop.f32.mrb[0].mxu0
    %v137 = vadd.f32 0.0, %v136
    %v138 = vpop.f32.mrb[0].mxu0
    %139 = vdwg.mxu0
    %v140 = vadd.f32 %v50, %v132
    %v141 = vadd.f32 %v51, %v137
    %vm142 = vcmask 785408
    %143 = vst.msk [vmem:[#allocation2] sm:$0xff] %vm142, %v140
    %144 = vst.msk [vmem:[#allocation2 + $0x8] sm:$0xff] %vm142, %v141
    // Predicated region
    $region26: #{tpu_custom_call.1} parent=1 // pred_check
      %p145 = pneg %p43
    $region27: #{tpu_custom_call.1} parent=1 // pred_check_branch
      %147 = sbr.rel (%p145) target = $region29
    $region28: #{tpu_custom_call.1} parent=1 // pred_region
      %v148 = vld [vmem:[#allocation2] sm:$0xff]
      %v149 = vld [vmem:[#allocation2 + $0x8] sm:$0xff]
      %v150 = vld [vmem:[%s2] sm:$0x1]
      %v152 = vlaneseq
      %v153 = vshrl.u32 %v152, 7
      %v154 = vsub.s32 0, %v153
      %v155 = vrot.slane %v150, %v154
      %v157 = vadd.f32 %v148, %v155
      %v158 = vadd.f32 %v149, %v155
      %159 = vst.msk [vmem:[#allocation8] sm:$0xff] %vm142, %v157
      %160 = vst.msk [vmem:[#allocation8 + $0x8] sm:$0xff] %vm142, %v158
    $region29: #{tpu_custom_call.1} parent=1 // pred_fallthru
      _
    // Predicated region
    $region30: #{tpu_custom_call.1} parent=1 // pred_check
      _
    $region31: #{tpu_custom_call.1} parent=1 // pred_check_branch
      %162 = sbr.rel (0) target = $region33
    $region32: #{tpu_custom_call.1} parent=1 // pred_region
      %s164 = ssub.s32 256, 256
      %165 = vsyncadd [#allocation5], %s164
      %s166 = sshll.u32 [#allocation8], 4
      %s167 = int_to_ptr.vmem [resolvable:$true] %s166
      %172 = dma.vmem_to_hbm [thread:$0]  %s167, 256, %s3, [#allocation5], 128, 128, 8
    $region33: #{tpu_custom_call.1} parent=1 // pred_fallthru
      _
    // Predicated region
    $region34: #{tpu_custom_call.1} parent=1 // pred_check
      _
    $region35: #{tpu_custom_call.1} parent=1 // pred_check_branch
      %174 = sbr.rel (0) target = $region37
    $region36: #{tpu_custom_call.1} parent=1 // pred_region
      %175 = dma.done [#allocation5], 256
    $region37: #{tpu_custom_call.1} parent=1 // pred_fallthru
      _
    %176 = vsyncpa [#allocation4], 1
    %177 = vsyncpa [#allocation7], 1
    %178 = vsyncpa [#allocation5], 1

</llo_original>
